<compile_context>
chip_gen: v7x
topology: tpu7x:2x2x1
jax: 0.10.0
libtpu: 0.0.40
codegen_flags: <defaults>
</compile_context>

<pallas_src>
import functools

import jax
import jax.numpy as jnp
from jax import lax
from jax.experimental import pallas as pl
from jax.experimental.pallas import tpu as pltpu

_VMEM_LIMIT = 48 * 1024 * 1024  # headroom vs. v7x's 64 MiB physical VMEM


def _pick_tile(dim, cap, align, prefer=None):
    """Largest divisor of `dim` that is <= cap and a multiple of `align`.

    If `prefer` is given (e.g. 256 for MXU width), multiples of `prefer` are tried
    first so tiles keep the 256-wide systolic array full on v6e/v7x.
    """
    if dim <= cap:
        return dim
    if prefer is not None and prefer >= align:
        c = cap - cap % prefer
        while c >= prefer:
            if dim % c == 0:
                return c
            c -= prefer
    c = cap - cap % align
    while c >= align:
        if dim % c == 0:
            return c
        c -= align
    # TODO(synk): pad the dimension (cdiv grid + masked epilogue) instead of falling
    # back to a whole-dim block when no aligned divisor exists.
    return dim


# ----------------------------- Pallas kernels ------------------------------ #

def _dense_kernel(x_ref, w_ref, b_ref, o_ref, acc_ref, *, activation):
    @pl.when(pl.program_id(2) == 0)
    def _():
        acc_ref[...] = jnp.zeros_like(acc_ref)

    acc_ref[...] += jnp.dot(x_ref[...], w_ref[...],
                            preferred_element_type=jnp.float32)

    @pl.when(pl.program_id(2) == pl.num_programs(2) - 1)
    def _():
        y = acc_ref[...] + b_ref[...]                   # bias is f32
        if activation == "gelu":
            y = jax.nn.gelu(y, approximate=False)       # exact erf GELU (HF Bert)
        elif activation == "tanh":
            y = jnp.tanh(y)                             # BERT pooler activation
        o_ref[...] = y.astype(o_ref.dtype)


def dense(x, w, b, activation="none", out_dtype=None,
          tm_cap=512, tn_cap=1024, tk_cap=768):
    """x: (M, K), w: (K, N) [bf16], b: (N,) -> (M, N)."""
    M, K = x.shape
    _, N = w.shape
    out_dtype = out_dtype or x.dtype
    tm = _pick_tile(M, tm_cap, 16)                       # 16-aligned rows (bf16 packing)
    tn = _pick_tile(N, tn_cap, 128, prefer=256)          # 256-aligned for v6e/v7x MXU
    tk = _pick_tile(K, tk_cap, 128, prefer=256)
    grid = (M // tm, N // tn, K // tk)
    return pl.pallas_call(
        functools.partial(_dense_kernel, activation=activation),
        out_shape=jax.ShapeDtypeStruct((M, N), out_dtype),
        grid=grid,
        in_specs=[
            pl.BlockSpec((tm, tk), lambda i, j, k: (i, k)),
            pl.BlockSpec((tk, tn), lambda i, j, k: (k, j)),
            pl.BlockSpec((1, tn), lambda i, j, k: (0, j)),
        ],
        out_specs=pl.BlockSpec((tm, tn), lambda i, j, k: (i, j)),
        scratch_shapes=[pltpu.VMEM((tm, tn), jnp.float32)],
        compiler_params=pltpu.CompilerParams(
            dimension_semantics=("parallel", "parallel", "arbitrary"),
            vmem_limit_bytes=_VMEM_LIMIT),
    )(x, w, b.reshape(1, N).astype(jnp.float32))


def _dense_add_ln_kernel(x_ref, w_ref, b_ref, r_ref, g_ref, bt_ref,
                         o_ref, acc_ref, *, eps):
    @pl.when(pl.program_id(1) == 0)
    def _():
        acc_ref[...] = jnp.zeros_like(acc_ref)

    acc_ref[...] += jnp.dot(x_ref[...], w_ref[...],
                            preferred_element_type=jnp.float32)

    @pl.when(pl.program_id(1) == pl.num_programs(1) - 1)
    def _():
        y = acc_ref[...] + b_ref[...] + r_ref[...].astype(jnp.float32)
        mu = jnp.mean(y, axis=-1, keepdims=True)
        var = jnp.mean((y - mu) * (y - mu), axis=-1, keepdims=True)
        yn = (y - mu) * lax.rsqrt(var + eps)
        o_ref[...] = (yn * g_ref[...] + bt_ref[...]).astype(o_ref.dtype)


def dense_add_ln(x, w, b, residual, gamma, beta, eps=1e-12, out_dtype=None,
                 tm_cap=512, tk_cap=1024):
    """Fused (x @ w + b + residual) -> LayerNorm.  N is kept whole (LN over full row)."""
    M, K = x.shape
    _, N = w.shape
    out_dtype = out_dtype or residual.dtype
    tm = _pick_tile(M, tm_cap, 16)
    tk = _pick_tile(K, tk_cap, 128, prefer=256)
    grid = (M // tm, K // tk)
    return pl.pallas_call(
        functools.partial(_dense_add_ln_kernel, eps=eps),
        out_shape=jax.ShapeDtypeStruct((M, N), out_dtype),
        grid=grid,
        in_specs=[
            pl.BlockSpec((tm, tk), lambda i, k: (i, k)),
            pl.BlockSpec((tk, N), lambda i, k: (k, 0)),
            pl.BlockSpec((1, N), lambda i, k: (0, 0)),
            pl.BlockSpec((tm, N), lambda i, k: (i, 0)),
            pl.BlockSpec((1, N), lambda i, k: (0, 0)),
            pl.BlockSpec((1, N), lambda i, k: (0, 0)),
        ],
        out_specs=pl.BlockSpec((tm, N), lambda i, k: (i, 0)),
        scratch_shapes=[pltpu.VMEM((tm, N), jnp.float32)],
        compiler_params=pltpu.CompilerParams(
            dimension_semantics=("parallel", "arbitrary"),
            vmem_limit_bytes=_VMEM_LIMIT),
    )(x, w, b.reshape(1, N).astype(jnp.float32), residual,
      gamma.reshape(1, N).astype(jnp.float32),
      beta.reshape(1, N).astype(jnp.float32))


def _emb_add_ln_kernel(w_ref, p_ref, t_ref, g_ref, b_ref, o_ref, *, eps):
    # word/pos/type embedding blocks are f32; sum + LayerNorm in one pass.
    x = w_ref[...] + p_ref[...] + t_ref[...]
    mu = jnp.mean(x, axis=-1, keepdims=True)
    var = jnp.mean((x - mu) * (x - mu), axis=-1, keepdims=True)
    y = (x - mu) * lax.rsqrt(var + eps)
    o_ref[...] = (y * g_ref[...] + b_ref[...]).astype(o_ref.dtype)


def emb_add_layernorm(word_e, pos_e, type_e, gamma, beta, eps=1e-12,
                      out_dtype=jnp.bfloat16, ts_cap=256):
    """word_e/type_e: (B, S, H) f32, pos_e: (S, H) f32 -> LayerNorm(word+pos+type)."""
    B, S, H = word_e.shape
    ts = _pick_tile(S, ts_cap, 16)
    grid = (B, S // ts)
    return pl.pallas_call(
        functools.partial(_emb_add_ln_kernel, eps=eps),
        out_shape=jax.ShapeDtypeStruct((B, S, H), out_dtype),
        grid=grid,
        in_specs=[
            pl.BlockSpec((None, ts, H), lambda b, s: (b, s, 0)),
            pl.BlockSpec((ts, H), lambda b, s: (s, 0)),
            pl.BlockSpec((None, ts, H), lambda b, s: (b, s, 0)),
            pl.BlockSpec((1, H), lambda b, s: (0, 0)),
            pl.BlockSpec((1, H), lambda b, s: (0, 0)),
        ],
        out_specs=pl.BlockSpec((None, ts, H), lambda b, s: (b, s, 0)),
        compiler_params=pltpu.CompilerParams(
            dimension_semantics=("parallel", "parallel"),
            vmem_limit_bytes=_VMEM_LIMIT),
    )(word_e, pos_e, type_e,
      gamma.reshape(1, H).astype(jnp.float32),
      beta.reshape(1, H).astype(jnp.float32))


def _attn_kernel(qkv_ref, m_ref, o_ref, *, n_heads, scale):
    # qkv_ref: (S, 3H) bf16 fused [Q_h0..Q_hN | K_h0..K_hN | V_h0..V_hN]
    # m_ref:   (1, S)  f32 additive key-mask bias (0 or -1e4)
    # o_ref:   (S, H)  bf16 context, written once, lane-dense.
    S, H = o_ref.shape
    Dh = H // n_heads
    bias = m_ref[...]
    parts = []
    for h in range(n_heads):
        # scale folded into q (S*Dh mults instead of S^2 on the score matrix)
        q = (qkv_ref[:, h * Dh:(h + 1) * Dh].astype(jnp.float32)
             * scale).astype(jnp.bfloat16)
        k = qkv_ref[:, H + h * Dh:H + (h + 1) * Dh]
        v = qkv_ref[:, 2 * H + h * Dh:2 * H + (h + 1) * Dh]
        # contract last axes directly (no k.T XLU transpose); f32 accumulation
        s = lax.dot_general(q, k, (((1,), (1,)), ((), ())),
                            preferred_element_type=jnp.float32)      # (S, S)
        s = s + bias
        s = s - jnp.max(s, axis=-1, keepdims=True)
        p = jnp.exp(s)
        denom = jnp.sum(p, axis=-1, keepdims=True)
        ctx = jnp.dot(p.astype(v.dtype), v,
                      preferred_element_type=jnp.float32)            # (S, Dh)
        parts.append(ctx * pl.reciprocal(denom, approx=False))       # normalize (S,Dh)
    # single lane-dense store of the full (S, H) context slab
    o_ref[...] = jnp.concatenate(parts, axis=-1).astype(o_ref.dtype)


def attention(qkv, mask_bias, *, n_heads):
    """qkv: (B, S, 3H) bf16 fused QKV; mask_bias: (B, 1, S) f32 -> ctx (B, S, H) bf16.

    Heads are split/merged inside the kernel (VMEM slices + concat), so no JAX-level
    transposes and no sub-128-lane output stores.
    """
    # TODO(synk): for S >= 1024 switch to a flash-style kv-tiled online-softmax kernel
    # so the (S,S) f32 score matrix never materializes in VMEM (critical on v7x 64MiB).
    B, S, threeH = qkv.shape
    H = threeH // 3
    Dh = H // n_heads
    scale = 1.0 / (Dh ** 0.5)
    return pl.pallas_call(
        functools.partial(_attn_kernel, n_heads=n_heads, scale=scale),
        out_shape=jax.ShapeDtypeStruct((B, S, H), qkv.dtype),
        grid=(B,),
        in_specs=[
            pl.BlockSpec((None, S, threeH), lambda b: (b, 0, 0)),
            pl.BlockSpec((None, 1, S), lambda b: (b, 0, 0)),
        ],
        out_specs=pl.BlockSpec((None, S, H), lambda b: (b, 0, 0)),
        compiler_params=pltpu.CompilerParams(
            dimension_semantics=("parallel",),
            vmem_limit_bytes=_VMEM_LIMIT),
    )(qkv, mask_bias)


# ------------------------------ BERT forward -------------------------------- #

def init_params(key, *, vocab, max_pos, type_vocab, hidden, n_heads,
                intermediate, n_layers):
    def normal(k, shape, dtype=jnp.bfloat16):
        return (0.02 * jax.random.normal(k, shape, dtype=jnp.float32)).astype(dtype)

    keys = jax.random.split(key, 4 + n_layers)
    params = {
        "word_emb": normal(keys[0], (vocab, hidden), jnp.float32),
        "pos_emb": normal(keys[1], (max_pos, hidden), jnp.float32),
        "type_emb": normal(keys[2], (type_vocab, hidden), jnp.float32),
        "emb_ln_g": jnp.ones((hidden,), jnp.float32),
        "emb_ln_b": jnp.zeros((hidden,), jnp.float32),
        "pooler_w": normal(keys[3], (hidden, hidden)),
        "pooler_b": jnp.zeros((hidden,), jnp.float32),
        "layers": [],
    }
    for l in range(n_layers):
        lk = jax.random.split(keys[4 + l], 4)
        params["layers"].append({
            # fused Q|K|V projection: (H, 3H)
            "wqkv": normal(lk[0], (hidden, 3 * hidden)),
            "bqkv": jnp.zeros((3 * hidden,), jnp.float32),
            "wo": normal(lk[1], (hidden, hidden)),
            "bo": jnp.zeros((hidden,), jnp.float32),
            "attn_ln_g": jnp.ones((hidden,), jnp.float32),
            "attn_ln_b": jnp.zeros((hidden,), jnp.float32),
            "w1": normal(lk[2], (hidden, intermediate)),
            "b1": jnp.zeros((intermediate,), jnp.float32),
            "w2": normal(lk[3], (intermediate, hidden)),
            "b2": jnp.zeros((hidden,), jnp.float32),
            "ffn_ln_g": jnp.ones((hidden,), jnp.float32),
            "ffn_ln_b": jnp.zeros((hidden,), jnp.float32),
        })
    return params


def bert_text_encoder_forward(params, text, *, n_heads):
    """text: (B, 3, S) int -> (last_hidden_state (B,S,H), pooler_output (B,H))."""
    input_ids = text[:, 0, :].astype(jnp.int32)
    input_mask = text[:, 1, :].astype(jnp.int32)
    segment_ids = text[:, 2, :].astype(jnp.int32)

    B, S = input_ids.shape
    H = params["word_emb"].shape[1]

    # --- embeddings: gathers are JAX glue, 3-way add + LayerNorm fused in Pallas ---
    word_e = params["word_emb"][input_ids]          # (B, S, H) f32
    pos_e = params["pos_emb"][:S]                   # (S, H)    f32
    type_e = params["type_emb"][segment_ids]        # (B, S, H) f32
    x = emb_add_layernorm(word_e, pos_e, type_e,
                          params["emb_ln_g"], params["emb_ln_b"],
                          out_dtype=jnp.bfloat16)   # (B, S, H) bf16
    x = x.reshape(B * S, H)

    # additive attention mask bias: (B, 1, S), key-position masking (standard BERT)
    mask_bias = (1.0 - input_mask.astype(jnp.float32))[:, None, :] * -10000.0

    for lp in params["layers"]:
        # --- self-attention: fused QKV matmul, head split/merge inside the kernel ---
        qkv = dense(x, lp["wqkv"], lp["bqkv"])                     # (B*S, 3H) bf16
        ctx = attention(qkv.reshape(B, S, 3 * H), mask_bias,
                        n_heads=n_heads)                           # (B, S, H) bf16
        # --- output projection fused with residual add + LayerNorm ---
        x = dense_add_ln(ctx.reshape(B * S, H), lp["wo"], lp["bo"], x,
                         lp["attn_ln_g"], lp["attn_ln_b"])

        # --- feed-forward (exact GELU) + fused residual add + LayerNorm ---
        h = dense(x, lp["w1"], lp["b1"], activation="gelu")
        x = dense_add_ln(h, lp["w2"], lp["b2"], x,
                         lp["ffn_ln_g"], lp["ffn_ln_b"])

    last_hidden_state = x.reshape(B, S, H).astype(jnp.float32)

    # --- pooler (dense + tanh on [CLS]) ---
    cls = x.reshape(B, S, H)[:, 0, :]                              # (B, H) bf16
    pooler_output = dense(cls, params["pooler_w"], params["pooler_b"],
                          activation="tanh", out_dtype=jnp.float32)

    # TODO(synk): tokenizer (BertTokenizer) has no Pallas equivalent; inputs are
    # assumed to already be token ids as in the PyTorch forward().
    return last_hidden_state, pooler_output


# ----------------------------------- main ----------------------------------- #

if __name__ == "__main__":
    # small BERT-like config consistent with the module's forward semantics
    VOCAB, MAX_POS, TYPE_VOCAB = 100, 16, 2
    HIDDEN, N_HEADS, INTERMEDIATE, N_LAYERS = 32, 2, 64, 2
    B, S = 2, 8

    key = jax.random.PRNGKey(0)
    pkey, ikey, mkey, skey = jax.random.split(key, 4)

    params = init_params(pkey, vocab=VOCAB, max_pos=MAX_POS,
                         type_vocab=TYPE_VOCAB, hidden=HIDDEN,
                         n_heads=N_HEADS, intermediate=INTERMEDIATE,
                         n_layers=N_LAYERS)

    input_ids = jax.random.randint(ikey, (B, S), 0, VOCAB, dtype=jnp.int32)
    # mask: first row fully valid, second row has two padding positions
    input_mask = jnp.array([[1] * S, [1] * (S - 2) + [0, 0]], dtype=jnp.int32)
    segment_ids = jax.random.randint(skey, (B, S), 0, TYPE_VOCAB, dtype=jnp.int32)
    text = jnp.stack([input_ids, input_mask, segment_ids], axis=1)   # (B, 3, S)

    last_hidden, pooled = bert_text_encoder_forward(params, text, n_heads=N_HEADS)
    jax.block_until_ready(last_hidden)
    jax.block_until_ready(pooled)

    assert last_hidden.shape == (B, S, HIDDEN)
    assert pooled.shape == (B, HIDDEN)
    assert bool(jnp.all(jnp.isfinite(last_hidden)))
    assert bool(jnp.all(jnp.isfinite(pooled)))
    print("KERNEL_OK")
</pallas_src>

<mosaic_0001>
module attributes {stable_mosaic.version = 11 : i64} {
  func.func @_emb_add_ln_kernel(%arg0: i32, %arg1: i32, %arg2: memref<1x8x32xf32, #tpu.memory_space<vmem>>, %arg3: memref<8x32xf32, #tpu.memory_space<vmem>>, %arg4: memref<1x8x32xf32, #tpu.memory_space<vmem>>, %arg5: memref<1x32xf32, #tpu.memory_space<vmem>>, %arg6: memref<1x32xf32, #tpu.memory_space<vmem>>, %arg7: memref<1x8x32xbf16, #tpu.memory_space<vmem>>) attributes {dimension_semantics = [#tpu.dimension_semantics<parallel>, #tpu.dimension_semantics<parallel>], iteration_bounds = array<i64: 2, 1>, scalar_prefetch = 0 : i64, scratch_operands = 0 : i64, tpu.core_type = #tpu.core_type<tc>, window_params = [{transform_indices = @transform_0, window_bounds = array<i64: 1, 8, 32>}, {transform_indices = @transform_1, window_bounds = array<i64: 8, 32>}, {transform_indices = @transform_2, window_bounds = array<i64: 1, 8, 32>}, {pipeline_mode = #tpu.pipeline_mode<synchronous>, transform_indices = @transform_3, window_bounds = array<i64: 1, 32>}, {pipeline_mode = #tpu.pipeline_mode<synchronous>, transform_indices = @transform_4, window_bounds = array<i64: 1, 32>}, {transform_indices = @transform_5, window_bounds = array<i64: 1, 8, 32>}]} {
    %c0 = arith.constant 0 : index
    %c0_0 = arith.constant 0 : index
    %c0_1 = arith.constant 0 : index
    %0 = vector.load %arg2[%c0, %c0_0, %c0_1] : memref<1x8x32xf32, #tpu.memory_space<vmem>>, vector<1x8x32xf32>
    %1 = vector.shape_cast %0 : vector<1x8x32xf32> to vector<8x32xf32>
    %c0_2 = arith.constant 0 : index
    %c0_3 = arith.constant 0 : index
    %2 = vector.load %arg3[%c0_2, %c0_3] : memref<8x32xf32, #tpu.memory_space<vmem>>, vector<8x32xf32>
    %3 = arith.addf %1, %2 : vector<8x32xf32>
    %c0_4 = arith.constant 0 : index
    %c0_5 = arith.constant 0 : index
    %c0_6 = arith.constant 0 : index
    %4 = vector.load %arg4[%c0_4, %c0_5, %c0_6] : memref<1x8x32xf32, #tpu.memory_space<vmem>>, vector<1x8x32xf32>
    %5 = vector.shape_cast %4 : vector<1x8x32xf32> to vector<8x32xf32>
    %6 = arith.addf %3, %5 : vector<8x32xf32>
    %cst = arith.constant dense<0.000000e+00> : vector<8xf32>
    %7 = vector.multi_reduction <add>, %6, %cst [1] : vector<8x32xf32> to vector<8xf32>
    %8 = vector.shape_cast %7 : vector<8xf32> to vector<8x1xf32>
    %cst_7 = arith.constant 3.200000e+01 : f32
    %9 = vector.broadcast %cst_7 : f32 to vector<8x1xf32>
    %10 = arith.divf %8, %9 : vector<8x1xf32>
    %11 = vector.broadcast %10 : vector<8x1xf32> to vector<8x32xf32>
    %12 = arith.subf %6, %11 : vector<8x32xf32>
    %13 = vector.broadcast %10 : vector<8x1xf32> to vector<8x32xf32>
    %14 = arith.subf %6, %13 : vector<8x32xf32>
    %15 = arith.mulf %12, %14 : vector<8x32xf32>
    %cst_8 = arith.constant dense<0.000000e+00> : vector<8xf32>
    %16 = vector.multi_reduction <add>, %15, %cst_8 [1] : vector<8x32xf32> to vector<8xf32>
    %17 = vector.shape_cast %16 : vector<8xf32> to vector<8x1xf32>
    %cst_9 = arith.constant 3.200000e+01 : f32
    %18 = vector.broadcast %cst_9 : f32 to vector<8x1xf32>
    %19 = arith.divf %17, %18 : vector<8x1xf32>
    %20 = vector.broadcast %10 : vector<8x1xf32> to vector<8x32xf32>
    %21 = arith.subf %6, %20 : vector<8x32xf32>
    %cst_10 = arith.constant 9.99999996E-13 : f32
    %22 = vector.broadcast %cst_10 : f32 to vector<8x1xf32>
    %23 = arith.addf %19, %22 : vector<8x1xf32>
    %24 = math.rsqrt %23 : vector<8x1xf32>
    %25 = vector.broadcast %24 : vector<8x1xf32> to vector<8x32xf32>
    %26 = arith.mulf %21, %25 : vector<8x32xf32>
    %c0_11 = arith.constant 0 : index
    %c0_12 = arith.constant 0 : index
    %27 = vector.load %arg5[%c0_11, %c0_12] : memref<1x32xf32, #tpu.memory_space<vmem>>, vector<1x32xf32>
    %28 = vector.broadcast %27 : vector<1x32xf32> to vector<8x32xf32>
    %29 = arith.mulf %26, %28 : vector<8x32xf32>
    %c0_13 = arith.constant 0 : index
    %c0_14 = arith.constant 0 : index
    %30 = vector.load %arg6[%c0_13, %c0_14] : memref<1x32xf32, #tpu.memory_space<vmem>>, vector<1x32xf32>
    %31 = vector.broadcast %30 : vector<1x32xf32> to vector<8x32xf32>
    %32 = arith.addf %29, %31 : vector<8x32xf32>
    %33 = arith.truncf %32 : vector<8x32xf32> to vector<8x32xbf16>
    %c0_15 = arith.constant 0 : index
    %c0_16 = arith.constant 0 : index
    %c0_17 = arith.constant 0 : index
    %34 = vector.load %arg7[%c0_15, %c0_16, %c0_17] : memref<1x8x32xbf16, #tpu.memory_space<vmem>>, vector<1x8x32xbf16>
    %35 = vector.shape_cast %34 : vector<1x8x32xbf16> to vector<8x32xbf16>
    %36 = vector.shape_cast %33 : vector<8x32xbf16> to vector<1x8x32xbf16>
    tpu.vector_store %arg7[%c0_15, %c0_16, %c0_17], %36 {strides = array<i32>} : memref<1x8x32xbf16, #tpu.memory_space<vmem>>, vector<1x8x32xbf16>,
    return
  }
  func.func @transform_0(%arg0: i32, %arg1: i32) -> (i32, i32, i32) {
    %c0_i32 = arith.constant 0 : i32
    %c0_i32_0 = arith.constant 0 : i32
    return %arg0, %arg1, %c0_i32 : i32, i32, i32
  }
  func.func @transform_1(%arg0: i32, %arg1: i32) -> (i32, i32) {
    %c0_i32 = arith.constant 0 : i32
    %c0_i32_0 = arith.constant 0 : i32
    return %arg1, %c0_i32 : i32, i32
  }
  func.func @transform_2(%arg0: i32, %arg1: i32) -> (i32, i32, i32) {
    %c0_i32 = arith.constant 0 : i32
    %c0_i32_0 = arith.constant 0 : i32
    return %arg0, %arg1, %c0_i32 : i32, i32, i32
  }
  func.func @transform_3(%arg0: i32, %arg1: i32) -> (i32, i32) {
    %c0_i32 = arith.constant 0 : i32
    %c0_i32_0 = arith.constant 0 : i32
    %c0_i32_1 = arith.constant 0 : i32
    return %c0_i32, %c0_i32_0 : i32, i32
  }
  func.func @transform_4(%arg0: i32, %arg1: i32) -> (i32, i32) {
    %c0_i32 = arith.constant 0 : i32
    %c0_i32_0 = arith.constant 0 : i32
    %c0_i32_1 = arith.constant 0 : i32
    return %c0_i32, %c0_i32_0 : i32, i32
  }
  func.func @transform_5(%arg0: i32, %arg1: i32) -> (i32, i32, i32) {
    %c0_i32 = arith.constant 0 : i32
    %c0_i32_0 = arith.constant 0 : i32
    return %arg0, %arg1, %c0_i32 : i32, i32, i32
  }
}

</mosaic_0001>

<llo_original>
// kernel: tpu_custom_call.1
$region0: #{tpu_custom_call.1}
  #allocation0 [shape = 'u32[]', space=smem, size = 0x4, offset = 0x4, fixed_abs, tag = 'smem constant byte address 0x4 - core index']
  #allocation1 [shape = 'u32[144,128]{1,0:T(1,128)}', space=vmem, size = 0x12000, scoped, tag = 'internal scratch']
  %s0 = inlined_call_operand.hbm [shape: f32[2,8,32], index: 0, kind: input, shape index: {}]
  %s1 = inlined_call_operand.hbm [shape: f32[8,32], index: 1, kind: input, shape index: {}]
  %s2 = inlined_call_operand.hbm [shape: f32[2,8,32], index: 2, kind: input, shape index: {}]
  %s3 = inlined_call_operand.vmem [shape: f32[1,32], index: 3, kind: input, shape index: {}]
  %s4 = inlined_call_operand.vmem [shape: f32[1,32], index: 4, kind: input, shape index: {}]
  %s5 = inlined_call_operand.hbm [shape: bf16[2,8,32], index: 5, kind: output, shape index: {}]
  %s6 = sld [smem:[#allocation0]]
  $region65: #{tpu_custom_call.1} parent=0
    _
  %s8 = ssub.s32 1, %s6
  %s9 = scalar_select 0, %s8, %s6
  $region1: #{tpu_custom_call.1} parent=0
    #allocation2 [shape = 'u8[8192]{0}', space=vmem, size = 0x2000, scoped, tag = 'input window, operand 0']
    #allocation3 [shape = 's32[2]{0}', space=sflag, size = 0x8, scoped, tag = 'scoped memory for tpu_custom_call.1']
    #allocation4 [shape = 's32[2]{0}', space=sflag, size = 0x8, scoped, tag = 'scoped memory for tpu_custom_call.1']
    #allocation5 [shape = 'u8[4096]{0}', space=vmem, size = 0x1000, scoped, tag = 'input window, operand 1, single buffered']
    #allocation6 [shape = 's32[1]{0}', space=sflag, size = 0x4, scoped, tag = 'scoped memory for tpu_custom_call.1']
    #allocation7 [shape = 'u8[8192]{0}', space=vmem, size = 0x2000, scoped, tag = 'input window, operand 2']
    #allocation8 [shape = 'u8[4096]{0}', space=vmem, size = 0x1000, scoped, tag = 'output window, operand 0']
    %10 = vsyncpa [#allocation3], 0
    %s11 = scalar_lea.sflag [#allocation3], 1
    %12 = vsyncpa %s11, 0
    %13 = vsyncpa [#allocation6], 0
    %14 = vsyncpa [#allocation4], 0
    %s15 = scalar_lea.sflag [#allocation4], 1
    %16 = vsyncpa %s15, 0
    loop: start=0, step=1, limit=4
    $region2: #{tpu_custom_call.1} parent=1 // loop_pre_header
      _
    $region3: #{tpu_custom_call.1} parent=1 // loop_header
      %s18 = sphi 0, %s22
      %p19 = scmp.ge.s32.totalorder %s18, 4
      %s25 = sphi 0, %s37
      %s26 = sphi 0, %s33
      %s27 = sphi 0, %s25
      %s28 = sphi 0, %s26
      %s29 = sphi 0, %s27
      %s30 = sphi 0, %s28
      %s42 = sphi 0, %s44
      %s45 = sphi 0, %s42
      %s46 = sphi 0, %s45
      %s62 = sphi 0, %s46
      %s68 = sphi 0, %s70
      %s71 = sphi 0, %s68
      %s72 = sphi 0, %s71
      %s88 = sphi 0, %s72
      %s96 = sphi 0, %s98
      %s99 = sphi 0, %s96
      %s100 = sphi 0, %s99
      %s116 = sphi 0, %s100
      %s120 = sphi 0, %s120
      %s122 = sphi 0, %s120
      %s123 = sphi 0, %s122
      %s137 = sphi 0, %s123
      %s141 = sphi 0, %s141
      %s143 = sphi 0, %s141
      %s144 = sphi 0, %s143
      %s158 = sphi 0, %s144
      %s166 = sphi 0, %s168
      %s169 = sphi 0, %s166
      %s170 = sphi 0, %s169
      %s186 = sphi 0, %s170
    $region4: #{tpu_custom_call.1} parent=1 // loop_header_branch
      %21 = sbr.rel (%p19) target = $region8
    $region5: #{tpu_custom_call.1} parent=1 // loop_body
      %s23 = ssub.s32 %s18, 1
      %s24 = ssub.s32 %s18, 2
      %s31 = sadd.s32 1, %s26
      %p32 = scmp.ge.s32.totalorder %s31, 1
      %s33 = scalar_select %p32, 0, %s31
      %s34 = sadd.s32 1, %s25
      %s35 = scalar_select %p32, %s34, %s25
      %p36 = scmp.ge.s32.totalorder %s35, 2
      %s37 = scalar_select %p36, 0, %s35
      %s38 = ssub.s32 %s25, %s37
      %s39 = ssub.s32 %s26, %s33
      %s40 = sor.u32 %s38, %s39
      %p41 = scmp.eq.s32.totalorder %s40, 0
      %s43 = sadd.s32 %s42, 1
      %s44 = scalar_select %p41, %s42, %s43
      %p47 = pneg %p41
      %p48 = scmp.eq.s32.totalorder %s18, 1
      %p49 = por %p47, %p48
      %p50 = scmp.ne.s32.totalorder %s42, %s45
      %p51 = scmp.eq.s32.totalorder %s18, 0
      %p52 = por %p50, %p51
      %p53 = scmp.ne.s32.totalorder %s42, %s45
      %p54 = scmp.eq.s32.totalorder %s23, 1
      %p55 = por %p53, %p54
      %p56 = scmp.ne.s32.totalorder %s45, %s46
      %p57 = scmp.eq.s32.totalorder %s23, 0
      %p58 = por %p56, %p57
      %p59 = scmp.ne.s32.totalorder %s45, %s46
      %p60 = scmp.eq.s32.totalorder %s24, 1
      %p61 = por %p59, %p60
      %p63 = scmp.ne.s32.totalorder %s46, %s62
      %p64 = scmp.eq.s32.totalorder %s24, 0
      %p65 = por %p63, %p64
      %s66 = ssub.s32 %s26, %s33
      %p67 = scmp.eq.s32.totalorder %s66, 0
      %s69 = sadd.s32 %s68, 1
      %s70 = scalar_select %p67, %s68, %s69
      %p73 = pneg %p67
      %p74 = scmp.eq.s32.totalorder %s18, 1
      %p75 = por %p73, %p74
      %p76 = scmp.ne.s32.totalorder %s68, %s71
      %p77 = scmp.eq.s32.totalorder %s18, 0
      %p78 = por %p76, %p77
      %p79 = scmp.ne.s32.totalorder %s68, %s71
      %p80 = scmp.eq.s32.totalorder %s23, 1
      %p81 = por %p79, %p80
      %p82 = scmp.ne.s32.totalorder %s71, %s72
      %p83 = scmp.eq.s32.totalorder %s23, 0
      %p84 = por %p82, %p83
      %p85 = scmp.ne.s32.totalorder %s71, %s72
      %p86 = scmp.eq.s32.totalorder %s24, 1
      %p87 = por %p85, %p86
      %p89 = scmp.ne.s32.totalorder %s72, %s88
      %p90 = scmp.eq.s32.totalorder %s24, 0
      %p91 = por %p89, %p90
      %s92 = ssub.s32 %s25, %s37
      %s93 = ssub.s32 %s26, %s33
      %s94 = sor.u32 %s92, %s93
      %p95 = scmp.eq.s32.totalorder %s94, 0
      %s97 = sadd.s32 %s96, 1
      %s98 = scalar_select %p95, %s96, %s97
      %p101 = pneg %p95
      %p102 = scmp.eq.s32.totalorder %s18, 1
      %p103 = por %p101, %p102
      %p104 = scmp.ne.s32.totalorder %s96, %s99
      %p105 = scmp.eq.s32.totalorder %s18, 0
      %p106 = por %p104, %p105
      %p107 = scmp.ne.s32.totalorder %s96, %s99
      %p108 = scmp.eq.s32.totalorder %s23, 1
      %p109 = por %p107, %p108
      %p110 = scmp.ne.s32.totalorder %s99, %s100
      %p111 = scmp.eq.s32.totalorder %s23, 0
      %p112 = por %p110, %p111
      %p113 = scmp.ne.s32.totalorder %s99, %s100
      %p114 = scmp.eq.s32.totalorder %s24, 1
      %p115 = por %p113, %p114
      %p117 = scmp.ne.s32.totalorder %s100, %s116
      %p118 = scmp.eq.s32.totalorder %s24, 0
      %p119 = por %p117, %p118
      %s121 = sadd.s32 %s120, 1
      %p124 = scmp.eq.s32.totalorder %s18, 1
      %p125 = scmp.ne.s32.totalorder %s120, %s122
      %p126 = scmp.eq.s32.totalorder %s18, 0
      %p127 = por %p125, %p126
      %p128 = scmp.ne.s32.totalorder %s120, %s122
      %p129 = scmp.eq.s32.totalorder %s23, 1
      %p130 = por %p128, %p129
      %p131 = scmp.ne.s32.totalorder %s122, %s123
      %p132 = scmp.eq.s32.totalorder %s23, 0
      %p133 = por %p131, %p132
      %p134 = scmp.ne.s32.totalorder %s122, %s123
      %p135 = scmp.eq.s32.totalorder %s24, 1
      %p136 = por %p134, %p135
      %p138 = scmp.ne.s32.totalorder %s123, %s137
      %p139 = scmp.eq.s32.totalorder %s24, 0
      %p140 = por %p138, %p139
      %s142 = sadd.s32 %s141, 1
      %p145 = scmp.eq.s32.totalorder %s18, 1
      %p146 = scmp.ne.s32.totalorder %s141, %s143
      %p147 = scmp.eq.s32.totalorder %s18, 0
      %p148 = por %p146, %p147
      %p149 = scmp.ne.s32.totalorder %s141, %s143
      %p150 = scmp.eq.s32.totalorder %s23, 1
      %p151 = por %p149, %p150
      %p152 = scmp.ne.s32.totalorder %s143, %s144
      %p153 = scmp.eq.s32.totalorder %s23, 0
      %p154 = por %p152, %p153
      %p155 = scmp.ne.s32.totalorder %s143, %s144
      %p156 = scmp.eq.s32.totalorder %s24, 1
      %p157 = por %p155, %p156
      %p159 = scmp.ne.s32.totalorder %s144, %s158
      %p160 = scmp.eq.s32.totalorder %s24, 0
      %p161 = por %p159, %p160
      %s162 = ssub.s32 %s25, %s37
      %s163 = ssub.s32 %s26, %s33
      %s164 = sor.u32 %s162, %s163
      %p165 = scmp.eq.s32.totalorder %s164, 0
      %s167 = sadd.s32 %s166, 1
      %s168 = scalar_select %p165, %s166, %s167
      %p171 = pneg %p165
      %p172 = scmp.eq.s32.totalorder %s18, 1
      %p173 = por %p171, %p172
      %p174 = scmp.ne.s32.totalorder %s166, %s169
      %p175 = scmp.eq.s32.totalorder %s18, 0
      %p176 = por %p174, %p175
      %p177 = scmp.ne.s32.totalorder %s166, %s169
      %p178 = scmp.eq.s32.totalorder %s23, 1
      %p179 = por %p177, %p178
      %p180 = scmp.ne.s32.totalorder %s169, %s170
      %p181 = scmp.eq.s32.totalorder %s23, 0
      %p182 = por %p180, %p181
      %p183 = scmp.ne.s32.totalorder %s169, %s170
      %p184 = scmp.eq.s32.totalorder %s24, 1
      %p185 = por %p183, %p184
      %p187 = scmp.ne.s32.totalorder %s170, %s186
      %p188 = scmp.eq.s32.totalorder %s24, 0
      %p189 = por %p187, %p188
      %p190 = scmp.le.s32.totalorder 1, %s18
      %p191 = scmp.lt.s32.totalorder %s18, 3
      %p192 = pnand %p190, %p191
      %p193 = pneg %p192
      // Predicated region
      $region9: #{tpu_custom_call.1} parent=5 // pred_check
        _
      $region10: #{tpu_custom_call.1} parent=5 // pred_check_branch
        %195 = sbr.rel (%p192) target = $region12
      $region11: #{tpu_custom_call.1} parent=5 // pred_region
        %s196 = ssub.s32 %s18, 1
        // Predicated region
        $region13: #{tpu_custom_call.1} parent=11 // pred_check
          %p197 = pneg %p84
        $region14: #{tpu_custom_call.1} parent=11 // pred_check_branch
          %199 = sbr.rel (%p197) target = $region16
        $region15: #{tpu_custom_call.1} parent=11 // pred_region
          %s201 = ssub.s32 128, 128
          %202 = vsyncadd [#allocation6], %s201
          %s203 = smul.addr %s28, 128
          %s204 = scalar_lea.hbm %s1, %s203
          %s206 = sshll.u32 [#allocation5], 4
          %s207 = int_to_ptr.vmem [resolvable:$true] %s206
          %209 = dma.hbm_to_vmem [thread:$0]  %s204, 128, %s207, [#allocation6]
        $region16: #{tpu_custom_call.1} parent=11 // pred_fallthru
          _
        // Predicated region
        $region17: #{tpu_custom_call.1} parent=11 // pred_check
          %p210 = pneg %p133
        $region18: #{tpu_custom_call.1} parent=11 // pred_check_branch
          %212 = sbr.rel (%p210) target = $region20
        $region19: #{tpu_custom_call.1} parent=11 // pred_region
          _
        $region20: #{tpu_custom_call.1} parent=11 // pred_fallthru
          _
        // Predicated region
        $region21: #{tpu_custom_call.1} parent=11 // pred_check
          %p213 = pneg %p154
        $region22: #{tpu_custom_call.1} parent=11 // pred_check_branch
          %215 = sbr.rel (%p213) target = $region24
        $region23: #{tpu_custom_call.1} parent=11 // pred_region
          _
        $region24: #{tpu_custom_call.1} parent=11 // pred_fallthru
          _
      $region12: #{tpu_custom_call.1} parent=5 // pred_fallthru
        _
      %p216 = scmp.lt.s32.totalorder %s18, 2
      // Predicated region
      $region25: #{tpu_custom_call.1} parent=5 // pred_check
        %p217 = pneg %p216
      $region26: #{tpu_custom_call.1} parent=5 // pred_check_branch
        %219 = sbr.rel (%p217) target = $region28
      $region27: #{tpu_custom_call.1} parent=5 // pred_region
        // Predicated region
        $region29: #{tpu_custom_call.1} parent=27 // pred_check
          %p220 = pneg %p52
        $region30: #{tpu_custom_call.1} parent=27 // pred_check_branch
          %222 = sbr.rel (%p220) target = $region32
        $region31: #{tpu_custom_call.1} parent=27 // pred_region
          %s223 = sand.u32 %s18, 1
          %s224 = scalar_lea.sflag [#allocation3], %s223
          %s225 = sand.u32 %s42, 1
          %s226 = smul.addr %s225, 8
          %s227 = scalar_lea.vmem [#allocation2], %s226
          %s229 = ssub.s32 128, 128
          %230 = vsyncadd %s224, %s229
          %s231 = sadd.s32 %s26, %s25
          %s232 = smul.addr %s231, 128
          %s233 = scalar_lea.hbm %s0, %s232
          %s235 = sshll.u32 %s227, 4
          %s236 = int_to_ptr.vmem [resolvable:$true] %s235
          %238 = dma.hbm_to_vmem [thread:$0]  %s233, 128, %s236, %s224
        $region32: #{tpu_custom_call.1} parent=27 // pred_fallthru
          _
        // Predicated region
        $region33: #{tpu_custom_call.1} parent=27 // pred_check
          %p239 = pneg %p106
        $region34: #{tpu_custom_call.1} parent=27 // pred_check_branch
          %241 = sbr.rel (%p239) target = $region36
        $region35: #{tpu_custom_call.1} parent=27 // pred_region
          %s242 = sand.u32 %s18, 1
          %s243 = scalar_lea.sflag [#allocation3], %s242
          %s244 = sand.u32 %s96, 1
          %s245 = smul.addr %s244, 8
          %s246 = scalar_lea.vmem [#allocation7], %s245
          %s248 = ssub.s32 128, 128
          %249 = vsyncadd %s243, %s248
          %s250 = sadd.s32 %s26, %s25
          %s251 = smul.addr %s250, 128
          %s252 = scalar_lea.hbm %s2, %s251
          %s254 = sshll.u32 %s246, 4
          %s255 = int_to_ptr.vmem [resolvable:$true] %s254
          %257 = dma.hbm_to_vmem [thread:$0]  %s252, 128, %s255, %s243
        $region36: #{tpu_custom_call.1} parent=27 // pred_fallthru
          _
      $region28: #{tpu_custom_call.1} parent=5 // pred_fallthru
        _
      %p258 = scmp.le.s32.totalorder 1, %s18
      %p259 = scmp.lt.s32.totalorder %s18, 3
      %p260 = pnand %p258, %p259
      %p261 = pneg %p260
      // Predicated region
      $region37: #{tpu_custom_call.1} parent=5 // pred_check
        _
      $region38: #{tpu_custom_call.1} parent=5 // pred_check_branch
        %263 = sbr.rel (%p260) target = $region40
      $region39: #{tpu_custom_call.1} parent=5 // pred_region
        %s264 = ssub.s32 %s18, 1
        %s265 = sand.u32 %s23, 1
        %s266 = scalar_lea.sflag [#allocation3], %s265
        %s267 = sand.u32 %s45, 1
        %s268 = smul.addr %s267, 8
        %s269 = scalar_lea.vmem [#allocation2], %s268
        // Predicated region
        $region41: #{tpu_custom_call.1} parent=39 // pred_check
          %p270 = pneg %p58
        $region42: #{tpu_custom_call.1} parent=39 // pred_check_branch
          %272 = sbr.rel (%p270) target = $region44
        $region43: #{tpu_custom_call.1} parent=39 // pred_region
          %273 = dma.done %s266, 128
        $region44: #{tpu_custom_call.1} parent=39 // pred_fallthru
          _
        // Predicated region
        $region45: #{tpu_custom_call.1} parent=39 // pred_check
          %p274 = pneg %p84
        $region46: #{tpu_custom_call.1} parent=39 // pred_check_branch
          %276 = sbr.rel (%p274) target = $region48
        $region47: #{tpu_custom_call.1} parent=39 // pred_region
          %277 = dma.done [#allocation6], 128
        $region48: #{tpu_custom_call.1} parent=39 // pred_fallthru
          _
        %s278 = sand.u32 %s23, 1
        %s279 = scalar_lea.sflag [#allocation3], %s278
        %s280 = sand.u32 %s99, 1
        %s281 = smul.addr %s280, 8
        %s282 = scalar_lea.vmem [#allocation7], %s281
        // Predicated region
        $region49: #{tpu_custom_call.1} parent=39 // pred_check
          %p283 = pneg %p112
        $region50: #{tpu_custom_call.1} parent=39 // pred_check_branch
          %285 = sbr.rel (%p283) target = $region52
        $region51: #{tpu_custom_call.1} parent=39 // pred_region
          %286 = dma.done %s279, 128
        $region52: #{tpu_custom_call.1} parent=39 // pred_fallthru
          _
        %s287 = sand.u32 %s23, 1
        %s288 = scalar_lea.sflag [#allocation3], %s287
        %s289 = sand.u32 %s45, 1
        %s290 = smul.addr %s289, 8
        %s291 = scalar_lea.vmem [#allocation2], %s290
        %p292 = pneg %p58
        %p293 = pneg %p55
        %p294 = pneg %p84
        %p295 = pneg %p81
        %s296 = sand.u32 %s23, 1
        %s297 = scalar_lea.sflag [#allocation3], %s296
        %s298 = sand.u32 %s99, 1
        %s299 = smul.addr %s298, 8
        %s300 = scalar_lea.vmem [#allocation7], %s299
        %p301 = pneg %p112
        %p302 = pneg %p109
        %p303 = pneg %p133
        %p304 = pneg %p130
        %p305 = pneg %p154
        %p306 = pneg %p151
        %p307 = pneg %p182
        %p308 = pneg %p179
        %s309 = sand.u32 %s169, 1
        %s310 = scalar_lea.sflag [#allocation4], %s309
        %s311 = sand.u32 %s169, 1
        %s312 = smul.addr %s311, 4
        %s313 = scalar_lea.vmem [#allocation8], %s312
        %v314 = vld [vmem:[%s269] sm:$0xff]
        %v315 = vld [vmem:[#allocation5] sm:$0xff]
        %v316 = vadd.f32 %v314, %v315
        %v317 = vld [vmem:[%s282] sm:$0xff]
        %v318 = vadd.f32 %v316, %v317
        %vm319 = vcmask 261120
        %v320 = vsel %vm319, %v318, 0.0
        %321 = vadd.xlane.f32.xlu0 %v320
        %v322 = vpop.xlane.xlu0 %321
        %v323 = vrcp.pop 32.0
        %v324 = vmul.f32 %v322, %v323
        %v325 = vsub.f32 %v318, %v324
        %v326 = vmul.f32 %v325, %v325
        %v327 = vsel %vm319, %v326, 0.0
        %328 = vadd.xlane.f32.xlu0 %v327
        %v329 = vpop.xlane.xlu0 %328
        %v330 = vmul.f32 %v329, %v323
        %v331 = vadd.f32 %v330, 1e-12
        %v332 = vrsqrt.pop %v331
        %v333 = vmul.f32 %v325, %v332
        %v334 = vld [vmem:[%s3] sm:$0x1]
        %v336 = vlaneseq
        %v337 = vshrl.u32 %v336, 7
        %v338 = vsub.s32 0, %v337
        %v339 = vrot.slane %v334, %v338
        %v341 = vmul.f32 %v333, %v339
        %v342 = vld [vmem:[%s4] sm:$0x1]
        %v344 = vlaneseq
        %v345 = vshrl.u32 %v344, 7
        %v346 = vsub.s32 0, %v345
        %v347 = vrot.slane %v342, %v346
        %v349 = vadd.f32 %v341, %v347
        %v350 = vpack.c.bf16 %v349, %v349
        %vm351 = vcmask 257024
        %352 = vst.msk [vmem:[%s313] sm:$0xf] %vm351, %v350
        %s353 = sand.u32 %s169, 1
        %s354 = scalar_lea.sflag [#allocation4], %s353
        %s355 = sand.u32 %s169, 1
        %s356 = smul.addr %s355, 4
        %s357 = scalar_lea.vmem [#allocation8], %s356
        // Predicated region
        $region53: #{tpu_custom_call.1} parent=39 // pred_check
          %p358 = pneg %p179
        $region54: #{tpu_custom_call.1} parent=39 // pred_check_branch
          %360 = sbr.rel (%p358) target = $region56
        $region55: #{tpu_custom_call.1} parent=39 // pred_region
          %s362 = ssub.s32 64, 64
          %363 = vsyncadd %s354, %s362
          %s364 = sadd.s32 %s28, %s27
          %s365 = smul.addr %s364, 64
          %s366 = scalar_lea.hbm %s5, %s365
          %s368 = sshll.u32 %s357, 4
          %s369 = int_to_ptr.vmem [resolvable:$true] %s368
          %371 = dma.vmem_to_hbm [thread:$0]  %s369, 64, %s366, %s354
        $region56: #{tpu_custom_call.1} parent=39 // pred_fallthru
          _
      $region40: #{tpu_custom_call.1} parent=5 // pred_fallthru
        _
      %p372 = scmp.le.s32.totalorder 2, %s18
      // Predicated region
      $region57: #{tpu_custom_call.1} parent=5 // pred_check
        %p373 = pneg %p372
      $region58: #{tpu_custom_call.1} parent=5 // pred_check_branch
        %375 = sbr.rel (%p373) target = $region60
      $region59: #{tpu_custom_call.1} parent=5 // pred_region
        %s376 = ssub.s32 %s18, 2
        // Predicated region
        $region61: #{tpu_custom_call.1} parent=59 // pred_check
          %p377 = pneg %p185
        $region62: #{tpu_custom_call.1} parent=59 // pred_check_branch
          %379 = sbr.rel (%p377) target = $region64
        $region63: #{tpu_custom_call.1} parent=59 // pred_region
          %s380 = sand.u32 %s170, 1
          %s381 = scalar_lea.sflag [#allocation4], %s380
          %s382 = sand.u32 %s170, 1
          %s383 = smul.addr %s382, 4
          %s384 = scalar_lea.vmem [#allocation8], %s383
          %385 = dma.done %s381, 64
        $region64: #{tpu_custom_call.1} parent=59 // pred_fallthru
          _
      $region60: #{tpu_custom_call.1} parent=5 // pred_fallthru
        _
    $region6: #{tpu_custom_call.1} parent=1 // loop_footer
      %s22 = sadd.s32 1, %s18
    $region7: #{tpu_custom_call.1} parent=1 // loop_footer_branch
      %17 = sbr.rel target = $region3
    $region8: #{tpu_custom_call.1} parent=1 // loop_exit
      _
    %386 = vsyncpa [#allocation3], 1
    %s387 = scalar_lea.sflag [#allocation3], 1
    %388 = vsyncpa %s387, 1
    %389 = vsyncpa [#allocation6], 1
    %390 = vsyncpa [#allocation4], 1
    %s391 = scalar_lea.sflag [#allocation4], 1
    %392 = vsyncpa %s391, 1

</llo_original>
